<compile_context>
chip_gen: v6e
topology: v6e:2x2x1
jax: 0.10.0
libtpu: 0.0.40
codegen_flags: <defaults>
</compile_context>

<pallas_src>
import math
import jax
import jax.numpy as jnp
from jax.experimental import pallas as pl
from jax.experimental.pallas import tpu as pltpu


def _branch_matmul_kernel(x_ref, a_ref, o_ref):
    # x_ref: (1, C*T, V)   one sample, flattened (C,T) rows
    # a_ref: (K, V, V)     pre-normalized adaptive adjacency
    # o_ref: (1, K, C*T, V)
    x = x_ref[0]                                           # (C*T, V), loaded once
    K = a_ref.shape[0]
    for k in range(K):                                     # static unroll over subsets
        o_ref[0, k] = jnp.dot(
            x, a_ref[k], preferred_element_type=jnp.float32).astype(o_ref.dtype)


def _fused_output_kernel(s_ref, x_ref, w_ref, wd_ref, shift_ref, o_ref):
    # s_ref:     (1, K*C, T*V)  stacked branch products (rows: branch-major, channel-minor)
    # x_ref:     (1, C,   T*V)  input for the down path
    # w_ref:     (O, K*C)       branch 1x1-conv weights with main-BN scale folded in
    # wd_ref:    (O, C)         down-path 1x1-conv weight with down-BN scale folded in
    # shift_ref: (O, 1)         folded branch biases + main-BN shift + down bias/BN shift
    # o_ref:     (1, O, T*V)    lane-dense output tile
    y = jnp.dot(w_ref[...], s_ref[0], preferred_element_type=jnp.float32)   # (O, T*V)
    y = y + jnp.dot(wd_ref[...], x_ref[0], preferred_element_type=jnp.float32)
    o_ref[0] = jnp.maximum(y + shift_ref[...], 0.0).astype(o_ref.dtype)


@jax.jit
def unit_gcn_forward(x_nctv, A, W, b, bn_gamma, bn_beta, bn_mean, bn_var,
                     Wd, bd, dbn_gamma, dbn_beta, dbn_mean, dbn_var, eps=1e-5):
    N, C, T, V = x_nctv.shape
    K, O, _ = W.shape

    # ---- hoisted normalization + constant folding (plain-JAX glue, runs once) ----
    # L2_norm: torch.norm(A, 2, dim=1, keepdim=True) + 1e-4  (epsilon AFTER the sqrt)
    An = A / (jnp.sqrt(jnp.sum(A * A, axis=1, keepdims=True)) + 1e-4)       # (K, V, V)

    bn_scale = bn_gamma / jnp.sqrt(bn_var + eps)                            # (O,)
    bn_shift = bn_beta - bn_mean * bn_scale
    d_scale = dbn_gamma / jnp.sqrt(dbn_var + eps)
    d_shift = dbn_beta - dbn_mean * d_scale

    W_fold = W * bn_scale[None, :, None]                                    # (K, O, C)
    W_full = jnp.concatenate([W_fold[k] for k in range(K)], axis=1)         # (O, K*C)
    Wd_fold = Wd * d_scale[:, None]                                         # (O, C)
    shift = (bn_scale * jnp.sum(b, axis=0) + bn_shift
             + d_scale * bd + d_shift).reshape(O, 1)                        # (O, 1)

    x_flat2 = x_nctv.reshape(N, C * T, V)        # free row-major reshape of NCHW
    x_flat3 = x_nctv.reshape(N, C, T * V)        # free row-major reshape of NCHW

    # ---- stage 1: tmp[k] = x @ An[k] for every subset, one grid step per sample ----
    tmp = pl.pallas_call(
        _branch_matmul_kernel,
        out_shape=jax.ShapeDtypeStruct((N, K, C * T, V), jnp.float32),
        grid=(N,),
        in_specs=[
            pl.BlockSpec((1, C * T, V), lambda n: (n, 0, 0)),
            pl.BlockSpec((K, V, V), lambda n: (0, 0, 0)),
        ],
        out_specs=pl.BlockSpec((1, K, C * T, V), lambda n: (n, 0, 0, 0)),
        compiler_params=pltpu.CompilerParams(
            dimension_semantics=("parallel",)),
    )(x_flat2, An)

    # (N, K, C*T, V) -> (N, K*C, T*V): merge of adjacent dims, row-major, no data movement.
    stacked = tmp.reshape(N, K * C, T * V)

    # ---- stage 2: single fused (O, K*C)@(K*C, T*V) matmul (K branches + main BN folded)
    #              + down path matmul + folded shift + ReLU, lane-dense output -------------
    out = pl.pallas_call(
        _fused_output_kernel,
        out_shape=jax.ShapeDtypeStruct((N, O, T * V), jnp.float32),
        grid=(N,),
        in_specs=[
            pl.BlockSpec((1, K * C, T * V), lambda n: (n, 0, 0)),
            pl.BlockSpec((1, C, T * V), lambda n: (n, 0, 0)),
            pl.BlockSpec((O, K * C), lambda n: (0, 0)),
            pl.BlockSpec((O, C), lambda n: (0, 0)),
            pl.BlockSpec((O, 1), lambda n: (0, 0)),
        ],
        out_specs=pl.BlockSpec((1, O, T * V), lambda n: (n, 0, 0)),
        compiler_params=pltpu.CompilerParams(
            dimension_semantics=("parallel",)),
    )(stacked, x_flat3, W_full, Wd_fold, shift)

    # free reshape back to NCHW = (N, O, T, V)
    return out.reshape(N, O, T, V)


def _reference(x, A, W, b, bn_gamma, bn_beta, bn_mean, bn_var,
               Wd, bd, dbn_gamma, dbn_beta, dbn_mean, dbn_var, eps=1e-5):
    K = A.shape[0]
    An = A / (jnp.sqrt(jnp.sum(A * A, axis=1, keepdims=True)) + 1e-4)
    y = None
    for i in range(K):
        t = jnp.einsum('nctu,uv->nctv', x, An[i])
        z = jnp.einsum('oc,nctv->notv', W[i], t) + b[i][None, :, None, None]
        y = z if y is None else y + z
    y = (bn_gamma / jnp.sqrt(bn_var + eps))[None, :, None, None] * (
        y - bn_mean[None, :, None, None]) + bn_beta[None, :, None, None]
    down = jnp.einsum('oc,nctv->notv', Wd, x) + bd[None, :, None, None]
    down = (dbn_gamma / jnp.sqrt(dbn_var + eps))[None, :, None, None] * (
        down - dbn_mean[None, :, None, None]) + dbn_beta[None, :, None, None]
    return jnp.maximum(y + down, 0.0)


if __name__ == "__main__":
    # Small shapes consistent with the module: x is (N, C, T, V)
    N, Cin, T, V = 2, 4, 16, 16
    Cout, K = 8, 3

    key = jax.random.PRNGKey(0)
    k_x, k_a, k_w, k_wd = jax.random.split(key, 4)

    x = jax.random.normal(k_x, (N, Cin, T, V), dtype=jnp.float32)

    # Adaptive adjacency PA (num_subset, V, V)
    A = jax.random.uniform(k_a, (K, V, V), dtype=jnp.float32)

    # conv_d branches: conv_branch_init -> normal(0, sqrt(2/(out*in*1*branches))), bias 0
    w_std = math.sqrt(2.0 / (Cout * Cin * 1 * K))
    W = jax.random.normal(k_w, (K, Cout, Cin), dtype=jnp.float32) * w_std
    b = jnp.zeros((K, Cout), dtype=jnp.float32)

    # main BN: bn_init(bn, 1e-6)
    bn_gamma = jnp.full((Cout,), 1e-6, dtype=jnp.float32)
    bn_beta = jnp.zeros((Cout,), dtype=jnp.float32)
    bn_mean = jnp.zeros((Cout,), dtype=jnp.float32)
    bn_var = jnp.ones((Cout,), dtype=jnp.float32)

    # down path (in_c != out_c): 1x1 conv (kaiming fan_out) + BN(scale=1)
    if Cin != Cout:
        wd_std = math.sqrt(2.0 / (Cout * 1 * 1))      # kaiming_normal fan_out for 1x1 conv
        Wd = jax.random.normal(k_wd, (Cout, Cin), dtype=jnp.float32) * wd_std
    else:
        Wd = jnp.eye(Cout, dtype=jnp.float32)         # identity down path
    bd = jnp.zeros((Cout,), dtype=jnp.float32)
    dbn_gamma = jnp.ones((Cout,), dtype=jnp.float32)
    dbn_beta = jnp.zeros((Cout,), dtype=jnp.float32)
    dbn_mean = jnp.zeros((Cout,), dtype=jnp.float32)
    dbn_var = jnp.ones((Cout,), dtype=jnp.float32)

    out = unit_gcn_forward(x, A, W, b, bn_gamma, bn_beta, bn_mean, bn_var,
                           Wd, bd, dbn_gamma, dbn_beta, dbn_mean, dbn_var)
    out = jax.block_until_ready(out)

    ref = _reference(x, A, W, b, bn_gamma, bn_beta, bn_mean, bn_var,
                     Wd, bd, dbn_gamma, dbn_beta, dbn_mean, dbn_var)
    assert out.shape == (N, Cout, T, V), out.shape
    assert jnp.allclose(out, ref, rtol=1e-3, atol=1e-3), float(jnp.max(jnp.abs(out - ref)))

    print("KERNEL_OK")
</pallas_src>

<mosaic_0001>
module attributes {stable_mosaic.version = 11 : i64} {
  func.func @_branch_matmul_kernel(%arg0: i32, %arg1: memref<1x64x16xf32, #tpu.memory_space<vmem>>, %arg2: memref<3x16x16xf32, #tpu.memory_space<vmem>>, %arg3: memref<1x3x64x16xf32, #tpu.memory_space<vmem>>) attributes {dimension_semantics = [#tpu.dimension_semantics<parallel>], iteration_bounds = array<i64: 2>, scalar_prefetch = 0 : i64, scratch_operands = 0 : i64, tpu.core_type = #tpu.core_type<tc>, window_params = [{transform_indices = @transform_0, window_bounds = array<i64: 1, 64, 16>}, {pipeline_mode = #tpu.pipeline_mode<synchronous>, transform_indices = @transform_1, window_bounds = array<i64: 3, 16, 16>}, {transform_indices = @transform_2, window_bounds = array<i64: 1, 3, 64, 16>}]} {
    %c0 = arith.constant 0 : index
    %c0_0 = arith.constant 0 : index
    %c0_1 = arith.constant 0 : index
    %0 = vector.load %arg1[%c0, %c0_0, %c0_1] : memref<1x64x16xf32, #tpu.memory_space<vmem>>, vector<1x64x16xf32>
    %1 = vector.shape_cast %0 : vector<1x64x16xf32> to vector<64x16xf32>
    %c0_2 = arith.constant 0 : index
    %c0_3 = arith.constant 0 : index
    %c0_4 = arith.constant 0 : index
    %2 = vector.load %arg2[%c0_2, %c0_3, %c0_4] : memref<3x16x16xf32, #tpu.memory_space<vmem>>, vector<1x16x16xf32>
    %3 = vector.shape_cast %2 : vector<1x16x16xf32> to vector<16x16xf32>
    %cst = arith.constant dense<0.000000e+00> : vector<64x16xf32>
    %4 = tpu.matmul %1, %3, %cst {dimension_numbers = #tpu.dot_dimension_numbers<[1], [0], [0], [1], [0, 0, 1, 1], [], []>} : vector<64x16xf32>, vector<16x16xf32>, vector<64x16xf32> -> vector<64x16xf32>
    %c0_5 = arith.constant 0 : index
    %c0_6 = arith.constant 0 : index
    %c0_7 = arith.constant 0 : index
    %c0_8 = arith.constant 0 : index
    %5 = vector.load %arg3[%c0_5, %c0_6, %c0_7, %c0_8] : memref<1x3x64x16xf32, #tpu.memory_space<vmem>>, vector<1x1x64x16xf32>
    %6 = vector.shape_cast %5 : vector<1x1x64x16xf32> to vector<64x16xf32>
    %7 = vector.shape_cast %4 : vector<64x16xf32> to vector<1x1x64x16xf32>
    tpu.vector_store %arg3[%c0_5, %c0_6, %c0_7, %c0_8], %7 {strides = array<i32>} : memref<1x3x64x16xf32, #tpu.memory_space<vmem>>, vector<1x1x64x16xf32>,
    %c1 = arith.constant 1 : index
    %c0_9 = arith.constant 0 : index
    %c0_10 = arith.constant 0 : index
    %8 = vector.load %arg2[%c1, %c0_9, %c0_10] : memref<3x16x16xf32, #tpu.memory_space<vmem>>, vector<1x16x16xf32>
    %9 = vector.shape_cast %8 : vector<1x16x16xf32> to vector<16x16xf32>
    %cst_11 = arith.constant dense<0.000000e+00> : vector<64x16xf32>
    %10 = tpu.matmul %1, %9, %cst_11 {dimension_numbers = #tpu.dot_dimension_numbers<[1], [0], [0], [1], [0, 0, 1, 1], [], []>} : vector<64x16xf32>, vector<16x16xf32>, vector<64x16xf32> -> vector<64x16xf32>
    %c0_12 = arith.constant 0 : index
    %c1_13 = arith.constant 1 : index
    %c0_14 = arith.constant 0 : index
    %c0_15 = arith.constant 0 : index
    %11 = vector.load %arg3[%c0_12, %c1_13, %c0_14, %c0_15] : memref<1x3x64x16xf32, #tpu.memory_space<vmem>>, vector<1x1x64x16xf32>
    %12 = vector.shape_cast %11 : vector<1x1x64x16xf32> to vector<64x16xf32>
    %13 = vector.shape_cast %10 : vector<64x16xf32> to vector<1x1x64x16xf32>
    tpu.vector_store %arg3[%c0_12, %c1_13, %c0_14, %c0_15], %13 {strides = array<i32>} : memref<1x3x64x16xf32, #tpu.memory_space<vmem>>, vector<1x1x64x16xf32>,
    %c2 = arith.constant 2 : index
    %c0_16 = arith.constant 0 : index
    %c0_17 = arith.constant 0 : index
    %14 = vector.load %arg2[%c2, %c0_16, %c0_17] : memref<3x16x16xf32, #tpu.memory_space<vmem>>, vector<1x16x16xf32>
    %15 = vector.shape_cast %14 : vector<1x16x16xf32> to vector<16x16xf32>
    %cst_18 = arith.constant dense<0.000000e+00> : vector<64x16xf32>
    %16 = tpu.matmul %1, %15, %cst_18 {dimension_numbers = #tpu.dot_dimension_numbers<[1], [0], [0], [1], [0, 0, 1, 1], [], []>} : vector<64x16xf32>, vector<16x16xf32>, vector<64x16xf32> -> vector<64x16xf32>
    %c0_19 = arith.constant 0 : index
    %c2_20 = arith.constant 2 : index
    %c0_21 = arith.constant 0 : index
    %c0_22 = arith.constant 0 : index
    %17 = vector.load %arg3[%c0_19, %c2_20, %c0_21, %c0_22] : memref<1x3x64x16xf32, #tpu.memory_space<vmem>>, vector<1x1x64x16xf32>
    %18 = vector.shape_cast %17 : vector<1x1x64x16xf32> to vector<64x16xf32>
    %19 = vector.shape_cast %16 : vector<64x16xf32> to vector<1x1x64x16xf32>
    tpu.vector_store %arg3[%c0_19, %c2_20, %c0_21, %c0_22], %19 {strides = array<i32>} : memref<1x3x64x16xf32, #tpu.memory_space<vmem>>, vector<1x1x64x16xf32>,
    return
  }
  func.func @transform_0(%arg0: i32) -> (i32, i32, i32) {
    %c0_i32 = arith.constant 0 : i32
    %c0_i32_0 = arith.constant 0 : i32
    %c0_i32_1 = arith.constant 0 : i32
    return %arg0, %c0_i32, %c0_i32_0 : i32, i32, i32
  }
  func.func @transform_1(%arg0: i32) -> (i32, i32, i32) {
    %c0_i32 = arith.constant 0 : i32
    %c0_i32_0 = arith.constant 0 : i32
    %c0_i32_1 = arith.constant 0 : i32
    %c0_i32_2 = arith.constant 0 : i32
    return %c0_i32, %c0_i32_0, %c0_i32_1 : i32, i32, i32
  }
  func.func @transform_2(%arg0: i32) -> (i32, i32, i32, i32) {
    %c0_i32 = arith.constant 0 : i32
    %c0_i32_0 = arith.constant 0 : i32
    %c0_i32_1 = arith.constant 0 : i32
    %c0_i32_2 = arith.constant 0 : i32
    return %arg0, %c0_i32, %c0_i32_0, %c0_i32_1 : i32, i32, i32, i32
  }
}

module attributes {stable_mosaic.version = 11 : i64} {
  func.func @_fused_output_kernel(%arg0: i32, %arg1: memref<1x12x256xf32, #tpu.memory_space<vmem>>, %arg2: memref<1x4x256xf32, #tpu.memory_space<vmem>>, %arg3: memref<8x12xf32, #tpu.memory_space<vmem>>, %arg4: memref<8x4xf32, #tpu.memory_space<vmem>>, %arg5: memref<8x1xf32, #tpu.memory_space<vmem>>, %arg6: memref<1x8x256xf32, #tpu.memory_space<vmem>>) attributes {dimension_semantics = [#tpu.dimension_semantics<parallel>], iteration_bounds = array<i64: 2>, scalar_prefetch = 0 : i64, scratch_operands = 0 : i64, tpu.core_type = #tpu.core_type<tc>, window_params = [{transform_indices = @transform_0, window_bounds = array<i64: 1, 12, 256>}, {transform_indices = @transform_1, window_bounds = array<i64: 1, 4, 256>}, {pipeline_mode = #tpu.pipeline_mode<synchronous>, transform_indices = @transform_2, window_bounds = array<i64: 8, 12>}, {pipeline_mode = #tpu.pipeline_mode<synchronous>, transform_indices = @transform_3, window_bounds = array<i64: 8, 4>}, {pipeline_mode = #tpu.pipeline_mode<synchronous>, transform_indices = @transform_4, window_bounds = array<i64: 8, 1>}, {transform_indices = @transform_5, window_bounds = array<i64: 1, 8, 256>}]} {
    %c0 = arith.constant 0 : index
    %c0_0 = arith.constant 0 : index
    %0 = vector.load %arg3[%c0, %c0_0] : memref<8x12xf32, #tpu.memory_space<vmem>>, vector<8x12xf32>
    %c0_1 = arith.constant 0 : index
    %c0_2 = arith.constant 0 : index
    %c0_3 = arith.constant 0 : index
    %1 = vector.load %arg1[%c0_1, %c0_2, %c0_3] : memref<1x12x256xf32, #tpu.memory_space<vmem>>, vector<1x12x256xf32>
    %2 = vector.shape_cast %1 : vector<1x12x256xf32> to vector<12x256xf32>
    %cst = arith.constant dense<0.000000e+00> : vector<8x256xf32>
    %3 = tpu.matmul %0, %2, %cst {dimension_numbers = #tpu.dot_dimension_numbers<[1], [0], [0], [1], [0, 0, 1, 1], [], []>} : vector<8x12xf32>, vector<12x256xf32>, vector<8x256xf32> -> vector<8x256xf32>
    %c0_4 = arith.constant 0 : index
    %c0_5 = arith.constant 0 : index
    %4 = vector.load %arg4[%c0_4, %c0_5] : memref<8x4xf32, #tpu.memory_space<vmem>>, vector<8x4xf32>
    %c0_6 = arith.constant 0 : index
    %c0_7 = arith.constant 0 : index
    %c0_8 = arith.constant 0 : index
    %5 = vector.load %arg2[%c0_6, %c0_7, %c0_8] : memref<1x4x256xf32, #tpu.memory_space<vmem>>, vector<1x4x256xf32>
    %6 = vector.shape_cast %5 : vector<1x4x256xf32> to vector<4x256xf32>
    %cst_9 = arith.constant dense<0.000000e+00> : vector<8x256xf32>
    %7 = tpu.matmul %4, %6, %cst_9 {dimension_numbers = #tpu.dot_dimension_numbers<[1], [0], [0], [1], [0, 0, 1, 1], [], []>} : vector<8x4xf32>, vector<4x256xf32>, vector<8x256xf32> -> vector<8x256xf32>
    %8 = arith.addf %3, %7 : vector<8x256xf32>
    %c0_10 = arith.constant 0 : index
    %c0_11 = arith.constant 0 : index
    %9 = vector.load %arg5[%c0_10, %c0_11] : memref<8x1xf32, #tpu.memory_space<vmem>>, vector<8x1xf32>
    %10 = vector.broadcast %9 : vector<8x1xf32> to vector<8x256xf32>
    %11 = arith.addf %8, %10 : vector<8x256xf32>
    %cst_12 = arith.constant 0.000000e+00 : f32
    %12 = vector.broadcast %cst_12 : f32 to vector<8x256xf32>
    %13 = arith.maximumf %11, %12 : vector<8x256xf32>
    %c0_13 = arith.constant 0 : index
    %c0_14 = arith.constant 0 : index
    %c0_15 = arith.constant 0 : index
    %14 = vector.load %arg6[%c0_13, %c0_14, %c0_15] : memref<1x8x256xf32, #tpu.memory_space<vmem>>, vector<1x8x256xf32>
    %15 = vector.shape_cast %14 : vector<1x8x256xf32> to vector<8x256xf32>
    %16 = vector.shape_cast %13 : vector<8x256xf32> to vector<1x8x256xf32>
    tpu.vector_store %arg6[%c0_13, %c0_14, %c0_15], %16 {strides = array<i32>} : memref<1x8x256xf32, #tpu.memory_space<vmem>>, vector<1x8x256xf32>,
    return
  }
  func.func @transform_0(%arg0: i32) -> (i32, i32, i32) {
    %c0_i32 = arith.constant 0 : i32
    %c0_i32_0 = arith.constant 0 : i32
    %c0_i32_1 = arith.constant 0 : i32
    return %arg0, %c0_i32, %c0_i32_0 : i32, i32, i32
  }
  func.func @transform_1(%arg0: i32) -> (i32, i32, i32) {
    %c0_i32 = arith.constant 0 : i32
    %c0_i32_0 = arith.constant 0 : i32
    %c0_i32_1 = arith.constant 0 : i32
    return %arg0, %c0_i32, %c0_i32_0 : i32, i32, i32
  }
  func.func @transform_2(%arg0: i32) -> (i32, i32) {
    %c0_i32 = arith.constant 0 : i32
    %c0_i32_0 = arith.constant 0 : i32
    %c0_i32_1 = arith.constant 0 : i32
    return %c0_i32, %c0_i32_0 : i32, i32
  }
  func.func @transform_3(%arg0: i32) -> (i32, i32) {
    %c0_i32 = arith.constant 0 : i32
    %c0_i32_0 = arith.constant 0 : i32
    %c0_i32_1 = arith.constant 0 : i32
    return %c0_i32, %c0_i32_0 : i32, i32
  }
  func.func @transform_4(%arg0: i32) -> (i32, i32) {
    %c0_i32 = arith.constant 0 : i32
    %c0_i32_0 = arith.constant 0 : i32
    %c0_i32_1 = arith.constant 0 : i32
    return %c0_i32, %c0_i32_0 : i32, i32
  }
  func.func @transform_5(%arg0: i32) -> (i32, i32, i32) {
    %c0_i32 = arith.constant 0 : i32
    %c0_i32_0 = arith.constant 0 : i32
    %c0_i32_1 = arith.constant 0 : i32
    return %arg0, %c0_i32, %c0_i32_0 : i32, i32, i32
  }
}

</mosaic_0001>

<llo_original>
// kernel: unit_gcn_forward.2
$region0: #{unit_gcn_forward.2}
  #allocation0 [shape = 'u32[]', space=smem, size = 0x4, offset = 0x4, fixed_abs, tag = 'smem constant byte address 0x4 - core index']
  #allocation1 [shape = 'u32[144,128]{1,0:T(1,128)}', space=vmem, size = 0x12000, scoped, tag = 'internal scratch']
  %s0 = inlined_call_operand.vmem [shape: f32[2,64,16], index: 0, kind: input, shape index: {}]
  %s1 = inlined_call_operand.vmem [shape: f32[3,16,16], index: 1, kind: input, shape index: {}]
  %s2 = inlined_call_operand.vmem [shape: f32[2,3,64,16], index: 2, kind: output, shape index: {}]
  %s3 = sld [smem:[#allocation0]]
  $region41: #{unit_gcn_forward.2} parent=0
    _
  %s5 = ssub.s32 1, %s3
  %s6 = scalar_select 0, %s5, %s3
  loop: start=0, step=1, limit=4
  $region2: #{unit_gcn_forward.2} parent=0 // loop_pre_header
    _
  $region3: #{unit_gcn_forward.2} parent=0 // loop_header
    %s8 = sphi 0, %s12
    %p9 = scmp.ge.s32.totalorder %s8, 4
    %s18 = sphi 0, %s20
    %s21 = sphi 0, %s18
    %s22 = sphi 0, %s21
    %s38 = sphi 0, %s22
    %s42 = sphi 0, %s42
    %s44 = sphi 0, %s42
    %s45 = sphi 0, %s44
    %s59 = sphi 0, %s45
    %s65 = sphi 0, %s67
    %s68 = sphi 0, %s65
    %s69 = sphi 0, %s68
    %s85 = sphi 0, %s69
  $region4: #{unit_gcn_forward.2} parent=0 // loop_header_branch
    %11 = sbr.rel (%p9) target = $region8
  $region5: #{unit_gcn_forward.2} parent=0 // loop_body
    %s13 = ssub.s32 %s8, 1
    %s14 = ssub.s32 %s8, 2
    %s15 = sadd.s32 %s8, 1
    %s16 = ssub.s32 %s8, %s15
    %p17 = scmp.eq.s32.totalorder %s16, 0
    %s19 = sadd.s32 %s18, 1
    %s20 = scalar_select %p17, %s18, %s19
    %p23 = pneg %p17
    %p24 = scmp.eq.s32.totalorder %s8, 1
    %p25 = por %p23, %p24
    %p26 = scmp.ne.s32.totalorder %s18, %s21
    %p27 = scmp.eq.s32.totalorder %s8, 0
    %p28 = por %p26, %p27
    %p29 = scmp.ne.s32.totalorder %s18, %s21
    %p30 = scmp.eq.s32.totalorder %s13, 1
    %p31 = por %p29, %p30
    %p32 = scmp.ne.s32.totalorder %s21, %s22
    %p33 = scmp.eq.s32.totalorder %s13, 0
    %p34 = por %p32, %p33
    %p35 = scmp.ne.s32.totalorder %s21, %s22
    %p36 = scmp.eq.s32.totalorder %s14, 1
    %p37 = por %p35, %p36
    %p39 = scmp.ne.s32.totalorder %s22, %s38
    %p40 = scmp.eq.s32.totalorder %s14, 0
    %p41 = por %p39, %p40
    %s43 = sadd.s32 %s42, 1
    %p46 = scmp.eq.s32.totalorder %s8, 1
    %p47 = scmp.ne.s32.totalorder %s42, %s44
    %p48 = scmp.eq.s32.totalorder %s8, 0
    %p49 = por %p47, %p48
    %p50 = scmp.ne.s32.totalorder %s42, %s44
    %p51 = scmp.eq.s32.totalorder %s13, 1
    %p52 = por %p50, %p51
    %p53 = scmp.ne.s32.totalorder %s44, %s45
    %p54 = scmp.eq.s32.totalorder %s13, 0
    %p55 = por %p53, %p54
    %p56 = scmp.ne.s32.totalorder %s44, %s45
    %p57 = scmp.eq.s32.totalorder %s14, 1
    %p58 = por %p56, %p57
    %p60 = scmp.ne.s32.totalorder %s45, %s59
    %p61 = scmp.eq.s32.totalorder %s14, 0
    %p62 = por %p60, %p61
    %s63 = ssub.s32 %s8, %s15
    %p64 = scmp.eq.s32.totalorder %s63, 0
    %s66 = sadd.s32 %s65, 1
    %s67 = scalar_select %p64, %s65, %s66
    %p70 = pneg %p64
    %p71 = scmp.eq.s32.totalorder %s8, 1
    %p72 = por %p70, %p71
    %p73 = scmp.ne.s32.totalorder %s65, %s68
    %p74 = scmp.eq.s32.totalorder %s8, 0
    %p75 = por %p73, %p74
    %p76 = scmp.ne.s32.totalorder %s65, %s68
    %p77 = scmp.eq.s32.totalorder %s13, 1
    %p78 = por %p76, %p77
    %p79 = scmp.ne.s32.totalorder %s68, %s69
    %p80 = scmp.eq.s32.totalorder %s13, 0
    %p81 = por %p79, %p80
    %p82 = scmp.ne.s32.totalorder %s68, %s69
    %p83 = scmp.eq.s32.totalorder %s14, 1
    %p84 = por %p82, %p83
    %p86 = scmp.ne.s32.totalorder %s69, %s85
    %p87 = scmp.eq.s32.totalorder %s14, 0
    %p88 = por %p86, %p87
    %p89 = scmp.le.s32.totalorder 1, %s8
    %p90 = scmp.lt.s32.totalorder %s8, 3
    %p91 = pnand %p89, %p90
    %p92 = pneg %p91
    // Predicated region
    $region9: #{unit_gcn_forward.2} parent=5 // pred_check
      _
    $region10: #{unit_gcn_forward.2} parent=5 // pred_check_branch
      %94 = sbr.rel (%p91) target = $region12
    $region11: #{unit_gcn_forward.2} parent=5 // pred_region
      %s95 = ssub.s32 %s8, 1
      // Predicated region
      $region13: #{unit_gcn_forward.2} parent=11 // pred_check
        %p96 = pneg %p55
      $region14: #{unit_gcn_forward.2} parent=11 // pred_check_branch
        %98 = sbr.rel (%p96) target = $region16
      $region15: #{unit_gcn_forward.2} parent=11 // pred_region
        _
      $region16: #{unit_gcn_forward.2} parent=11 // pred_fallthru
        _
    $region12: #{unit_gcn_forward.2} parent=5 // pred_fallthru
      _
    %p99 = scmp.lt.s32.totalorder %s8, 2
    // Predicated region
    $region17: #{unit_gcn_forward.2} parent=5 // pred_check
      %p100 = pneg %p99
    $region18: #{unit_gcn_forward.2} parent=5 // pred_check_branch
      %102 = sbr.rel (%p100) target = $region20
    $region19: #{unit_gcn_forward.2} parent=5 // pred_region
      // Predicated region
      $region21: #{unit_gcn_forward.2} parent=19 // pred_check
        %p103 = pneg %p28
      $region22: #{unit_gcn_forward.2} parent=19 // pred_check_branch
        %105 = sbr.rel (%p103) target = $region24
      $region23: #{unit_gcn_forward.2} parent=19 // pred_region
        %p106 = scmp.lt.s32.totalorder %s8, 1
        %s107 = scalar_select %p106, %s8, 1
        %s108 = smul.addr %s107, 8
        %s109 = smul.addr %s108, 8
        %s110 = scalar_lea.vmem %s0, %s109
      $region24: #{unit_gcn_forward.2} parent=19 // pred_fallthru
        _
    $region20: #{unit_gcn_forward.2} parent=5 // pred_fallthru
      _
    %p111 = scmp.le.s32.totalorder 1, %s8
    %p112 = scmp.lt.s32.totalorder %s8, 3
    %p113 = pnand %p111, %p112
    %p114 = pneg %p113
    // Predicated region
    $region25: #{unit_gcn_forward.2} parent=5 // pred_check
      _
    $region26: #{unit_gcn_forward.2} parent=5 // pred_check_branch
      %116 = sbr.rel (%p113) target = $region28
    $region27: #{unit_gcn_forward.2} parent=5 // pred_region
      %s117 = ssub.s32 %s8, 1
      %p118 = scmp.lt.s32.totalorder %s13, 1
      %s119 = scalar_select %p118, %s13, 1
      %s120 = smul.addr %s119, 8
      %s121 = smul.addr %s120, 8
      %s122 = scalar_lea.vmem %s0, %s121
      %p123 = pneg %p34
      %p124 = pneg %p31
      %p125 = pneg %p55
      %p126 = pneg %p52
      %p127 = pneg %p81
      %p128 = pneg %p78
      %p129 = scmp.lt.s32.totalorder %s13, 1
      %s130 = scalar_select %p129, %s13, 1
      %s131 = smul.addr %s130, 24
      %s132 = smul.addr %s131, 8
      %s133 = scalar_lea.vmem %s2, %s132
      %p134 = scmp.lt.s32.totalorder %s13, 1
      %s135 = scalar_select %p134, %s13, 1
      %s136 = smul.addr %s135, 8
      %s137 = smul.addr %s136, 8
      %s138 = scalar_lea.vmem %s0, %s137
      %p139 = scmp.lt.s32.totalorder %s13, 1
      %s140 = scalar_select %p139, %s13, 1
      %s141 = smul.addr %s140, 24
      %s142 = smul.addr %s141, 8
      %s143 = scalar_lea.vmem %s2, %s142
      %v144 = vld [vmem:[%s138] sm:$0xff]
      %v145 = vld [vmem:[%s138 + $0x8] sm:$0xff]
      %v146 = vld [vmem:[%s138 + $0x10] sm:$0xff]
      %v147 = vld [vmem:[%s138 + $0x18] sm:$0xff]
      %v148 = vld [vmem:[%s138 + $0x20] sm:$0xff]
      %v149 = vld [vmem:[%s138 + $0x28] sm:$0xff]
      %v150 = vld [vmem:[%s138 + $0x30] sm:$0xff]
      %v151 = vld [vmem:[%s138 + $0x38] sm:$0xff]
      %v152 = vld [vmem:[%s1] sm:$0xff]
      %v153 = vld [vmem:[%s1 + $0x8] sm:$0xff]
      %vm154 = vcmask 130048
      %v156 = vsel %vm154, %v144, 0
      %v159 = vsel %vm154, %v145, 0
      %v162 = vsel %vm154, %v146, 0
      %v165 = vsel %vm154, %v147, 0
      %v168 = vsel %vm154, %v148, 0
      %v171 = vsel %vm154, %v149, 0
      %v174 = vsel %vm154, %v150, 0
      %v177 = vsel %vm154, %v151, 0
      %179 = vmatprep.subr.mxu0 0.0
      %180 = vmatpush1.msra.mxu0 0.0
      %181 = vmatprep.subr.mxu0 0.0
      %182 = vmatpush1.msra.mxu0 0.0
      %183 = vmatprep.subr.mxu0 0.0
      %184 = vmatpush1.msra.mxu0 0.0
      %185 = vmatprep.subr.mxu0 0.0
      %186 = vmatpush1.msra.mxu0 0.0
      %187 = vmatprep.subr.mxu0 0.0
      %188 = vmatpush1.msra.mxu0 0.0
      %189 = vmatprep.subr.mxu0 0.0
      %190 = vmatpush1.msra.mxu0 0.0
      %191 = vmatprep.subr.mxu0 0.0
      %192 = vmatpush1.msra.mxu0 0.0
      %193 = vmatprep.subr.mxu0 0.0
      %194 = vmatpush1.msra.mxu0 0.0
      %195 = vmatprep.subr.mxu0 0.0
      %196 = vmatpush1.msra.mxu0 0.0
      %197 = vmatprep.subr.mxu0 0.0
      %198 = vmatpush1.msra.mxu0 0.0
      %199 = vmatprep.subr.mxu0 0.0
      %200 = vmatpush1.msra.mxu0 0.0
      %201 = vmatprep.subr.mxu0 0.0
      %202 = vmatpush1.msra.mxu0 0.0
      %203 = vmatprep.subr.mxu0 0.0
      %204 = vmatpush1.msra.mxu0 0.0
      %205 = vmatprep.subr.mxu0 0.0
      %206 = vmatpush1.msra.mxu0 0.0
      %207 = vmatprep.subr.mxu0 0.0
      %208 = vmatpush1.msra.mxu0 %v153
      %209 = vmatprep.subr.mxu0 0.0
      %210 = vmatpush1.msra.mxu0 %v152
      %211 = vmatprep.subr.mxu0 0.0
      %212 = vmatpush2.msra.mxu0 0.0
      %213 = vmatprep.subr.mxu0 0.0
      %214 = vmatpush2.msra.mxu0 0.0
      %215 = vmatprep.subr.mxu0 0.0
      %216 = vmatpush2.msra.mxu0 0.0
      %217 = vmatprep.subr.mxu0 0.0
      %218 = vmatpush2.msra.mxu0 0.0
      %219 = vmatprep.subr.mxu0 0.0
      %220 = vmatpush2.msra.mxu0 0.0
      %221 = vmatprep.subr.mxu0 0.0
      %222 = vmatpush2.msra.mxu0 0.0
      %223 = vmatprep.subr.mxu0 0.0
      %224 = vmatpush2.msra.mxu0 0.0
      %225 = vmatprep.subr.mxu0 0.0
      %226 = vmatpush2.msra.mxu0 0.0
      %227 = vmatprep.subr.mxu0 0.0
      %228 = vmatpush2.msra.mxu0 0.0
      %229 = vmatprep.subr.mxu0 0.0
      %230 = vmatpush2.msra.mxu0 0.0
      %231 = vmatprep.subr.mxu0 0.0
      %232 = vmatpush2.msra.mxu0 0.0
      %233 = vmatprep.subr.mxu0 0.0
      %234 = vmatpush2.msra.mxu0 0.0
      %235 = vmatprep.subr.mxu0 0.0
      %236 = vmatpush2.msra.mxu0 0.0
      %237 = vmatprep.subr.mxu0 0.0
      %238 = vmatpush2.msra.mxu0 0.0
      %239 = vmatprep.subr.mxu0 0.0
      %240 = vmatpush2.msra.mxu0 0.0
      %241 = vmatprep.subr.mxu0 0.0
      %242 = vmatpush2.msra.mxu0 0.0
      %243 = vmatprep.mubr.f32.mxu0 0.0
      %244 = vmatmul.mubr.f32.gmra.mxu0 %v156
      %v245 = vpop.f32.mrf.mxu0
      %v246 = vadd.f32 0.0, %v245
      %v247 = vpop.f32.mrf.mxu0
      %248 = vmatprep.mubr.f32.mxu0 0.0
      %249 = vmatmul.mubr.f32.gmra.mxu0 %v159
      %v250 = vpop.f32.mrf.mxu0
      %v251 = vadd.f32 0.0, %v250
      %v252 = vpop.f32.mrf.mxu0
      %253 = vmatprep.mubr.f32.mxu0 0.0
      %254 = vmatmul.mubr.f32.gmra.mxu0 %v162
      %v255 = vpop.f32.mrf.mxu0
      %v256 = vadd.f32 0.0, %v255
      %v257 = vpop.f32.mrf.mxu0
      %258 = vmatprep.mubr.f32.mxu0 0.0
      %259 = vmatmul.mubr.f32.gmra.mxu0 %v165
      %v260 = vpop.f32.mrf.mxu0
      %v261 = vadd.f32 0.0, %v260
      %v262 = vpop.f32.mrf.mxu0
      %263 = vmatprep.mubr.f32.mxu0 0.0
      %264 = vmatmul.mubr.f32.gmra.mxu0 %v168
      %v265 = vpop.f32.mrf.mxu0
      %v266 = vadd.f32 0.0, %v265
      %v267 = vpop.f32.mrf.mxu0
      %268 = vmatprep.mubr.f32.mxu0 0.0
      %269 = vmatmul.mubr.f32.gmra.mxu0 %v171
      %v270 = vpop.f32.mrf.mxu0
      %v271 = vadd.f32 0.0, %v270
      %v272 = vpop.f32.mrf.mxu0
      %273 = vmatprep.mubr.f32.mxu0 0.0
      %274 = vmatmul.mubr.f32.gmra.mxu0 %v174
      %v275 = vpop.f32.mrf.mxu0
      %v276 = vadd.f32 0.0, %v275
      %v277 = vpop.f32.mrf.mxu0
      %278 = vmatprep.mubr.f32.mxu0 0.0
      %279 = vmatmul.mubr.f32.gmra.mxu0 %v177
      %v280 = vpop.f32.mrf.mxu0
      %v281 = vadd.f32 0.0, %v280
      %v282 = vpop.f32.mrf.mxu0
      %283 = vdwg.mxu0
      %284 = vst.msk [vmem:[%s143] sm:$0xff] %vm154, %v246
      %285 = vst.msk [vmem:[%s143 + $0x8] sm:$0xff] %vm154, %v251
      %286 = vst.msk [vmem:[%s143 + $0x10] sm:$0xff] %vm154, %v256
      %287 = vst.msk [vmem:[%s143 + $0x18] sm:$0xff] %vm154, %v261
      %288 = vst.msk [vmem:[%s143 + $0x20] sm:$0xff] %vm154, %v266
      %289 = vst.msk [vmem:[%s143 + $0x28] sm:$0xff] %vm154, %v271
      %290 = vst.msk [vmem:[%s143 + $0x30] sm:$0xff] %vm154, %v276
      %291 = vst.msk [vmem:[%s143 + $0x38] sm:$0xff] %vm154, %v281
      %s292 = scalar_lea.vmem %s1, 16
      %v293 = vld [vmem:[%s292] sm:$0xff]
      %v294 = vld [vmem:[%s292 + $0x8] sm:$0xff]
      %295 = vmatprep.subr.mxu0 0.0
      %296 = vmatpush1.msra.mxu0 0.0
      %297 = vmatprep.subr.mxu0 0.0
      %298 = vmatpush1.msra.mxu0 0.0
      %299 = vmatprep.subr.mxu0 0.0
      %300 = vmatpush1.msra.mxu0 0.0
      %301 = vmatprep.subr.mxu0 0.0
      %302 = vmatpush1.msra.mxu0 0.0
      %303 = vmatprep.subr.mxu0 0.0
      %304 = vmatpush1.msra.mxu0 0.0
      %305 = vmatprep.subr.mxu0 0.0
      %306 = vmatpush1.msra.mxu0 0.0
      %307 = vmatprep.subr.mxu0 0.0
      %308 = vmatpush1.msra.mxu0 0.0
      %309 = vmatprep.subr.mxu0 0.0
      %310 = vmatpush1.msra.mxu0 0.0
      %311 = vmatprep.subr.mxu0 0.0
      %312 = vmatpush1.msra.mxu0 0.0
      %313 = vmatprep.subr.mxu0 0.0
      %314 = vmatpush1.msra.mxu0 0.0
      %315 = vmatprep.subr.mxu0 0.0
      %316 = vmatpush1.msra.mxu0 0.0
      %317 = vmatprep.subr.mxu0 0.0
      %318 = vmatpush1.msra.mxu0 0.0
      %319 = vmatprep.subr.mxu0 0.0
      %320 = vmatpush1.msra.mxu0 0.0
      %321 = vmatprep.subr.mxu0 0.0
      %322 = vmatpush1.msra.mxu0 0.0
      %323 = vmatprep.subr.mxu0 0.0
      %324 = vmatpush1.msra.mxu0 %v294
      %325 = vmatprep.subr.mxu0 0.0
      %326 = vmatpush1.msra.mxu0 %v293
      %327 = vmatprep.subr.mxu0 0.0
      %328 = vmatpush2.msra.mxu0 0.0
      %329 = vmatprep.subr.mxu0 0.0
      %330 = vmatpush2.msra.mxu0 0.0
      %331 = vmatprep.subr.mxu0 0.0
      %332 = vmatpush2.msra.mxu0 0.0
      %333 = vmatprep.subr.mxu0 0.0
      %334 = vmatpush2.msra.mxu0 0.0
      %335 = vmatprep.subr.mxu0 0.0
      %336 = vmatpush2.msra.mxu0 0.0
      %337 = vmatprep.subr.mxu0 0.0
      %338 = vmatpush2.msra.mxu0 0.0
      %339 = vmatprep.subr.mxu0 0.0
      %340 = vmatpush2.msra.mxu0 0.0
      %341 = vmatprep.subr.mxu0 0.0
      %342 = vmatpush2.msra.mxu0 0.0
      %343 = vmatprep.subr.mxu0 0.0
      %344 = vmatpush2.msra.mxu0 0.0
      %345 = vmatprep.subr.mxu0 0.0
      %346 = vmatpush2.msra.mxu0 0.0
      %347 = vmatprep.subr.mxu0 0.0
      %348 = vmatpush2.msra.mxu0 0.0
      %349 = vmatprep.subr.mxu0 0.0
      %350 = vmatpush2.msra.mxu0 0.0
      %351 = vmatprep.subr.mxu0 0.0
      %352 = vmatpush2.msra.mxu0 0.0
      %353 = vmatprep.subr.mxu0 0.0
      %354 = vmatpush2.msra.mxu0 0.0
      %355 = vmatprep.subr.mxu0 0.0
      %356 = vmatpush2.msra.mxu0 0.0
      %357 = vmatprep.subr.mxu0 0.0
      %358 = vmatpush2.msra.mxu0 0.0
      %359 = vmatprep.mubr.f32.mxu0 0.0
      %360 = vmatmul.mubr.f32.gmra.mxu0 %v156
      %v361 = vpop.f32.mrf.mxu0
      %v362 = vadd.f32 0.0, %v361
      %v363 = vpop.f32.mrf.mxu0
      %364 = vmatprep.mubr.f32.mxu0 0.0
      %365 = vmatmul.mubr.f32.gmra.mxu0 %v159
      %v366 = vpop.f32.mrf.mxu0
      %v367 = vadd.f32 0.0, %v366
      %v368 = vpop.f32.mrf.mxu0
      %369 = vmatprep.mubr.f32.mxu0 0.0
      %370 = vmatmul.mubr.f32.gmra.mxu0 %v162
      %v371 = vpop.f32.mrf.mxu0
      %v372 = vadd.f32 0.0, %v371
      %v373 = vpop.f32.mrf.mxu0
      %374 = vmatprep.mubr.f32.mxu0 0.0
      %375 = vmatmul.mubr.f32.gmra.mxu0 %v165
      %v376 = vpop.f32.mrf.mxu0
      %v377 = vadd.f32 0.0, %v376
      %v378 = vpop.f32.mrf.mxu0
      %379 = vmatprep.mubr.f32.mxu0 0.0
      %380 = vmatmul.mubr.f32.gmra.mxu0 %v168
      %v381 = vpop.f32.mrf.mxu0
      %v382 = vadd.f32 0.0, %v381
      %v383 = vpop.f32.mrf.mxu0
      %384 = vmatprep.mubr.f32.mxu0 0.0
      %385 = vmatmul.mubr.f32.gmra.mxu0 %v171
      %v386 = vpop.f32.mrf.mxu0
      %v387 = vadd.f32 0.0, %v386
      %v388 = vpop.f32.mrf.mxu0
      %389 = vmatprep.mubr.f32.mxu0 0.0
      %390 = vmatmul.mubr.f32.gmra.mxu0 %v174
      %v391 = vpop.f32.mrf.mxu0
      %v392 = vadd.f32 0.0, %v391
      %v393 = vpop.f32.mrf.mxu0
      %394 = vmatprep.mubr.f32.mxu0 0.0
      %395 = vmatmul.mubr.f32.gmra.mxu0 %v177
      %v396 = vpop.f32.mrf.mxu0
      %v397 = vadd.f32 0.0, %v396
      %v398 = vpop.f32.mrf.mxu0
      %399 = vdwg.mxu0
      %s400 = scalar_lea.vmem %s143, 64
      %401 = vst.msk [vmem:[%s400] sm:$0xff] %vm154, %v362
      %402 = vst.msk [vmem:[%s400 + $0x8] sm:$0xff] %vm154, %v367
      %403 = vst.msk [vmem:[%s400 + $0x10] sm:$0xff] %vm154, %v372
      %404 = vst.msk [vmem:[%s400 + $0x18] sm:$0xff] %vm154, %v377
      %405 = vst.msk [vmem:[%s400 + $0x20] sm:$0xff] %vm154, %v382
      %406 = vst.msk [vmem:[%s400 + $0x28] sm:$0xff] %vm154, %v387
      %407 = vst.msk [vmem:[%s400 + $0x30] sm:$0xff] %vm154, %v392
      %408 = vst.msk [vmem:[%s400 + $0x38] sm:$0xff] %vm154, %v397
      %s409 = scalar_lea.vmem %s1, 32
      %v410 = vld [vmem:[%s409] sm:$0xff]
      %v411 = vld [vmem:[%s409 + $0x8] sm:$0xff]
      %412 = vmatprep.subr.mxu0 0.0
      %413 = vmatpush1.msra.mxu0 0.0
      %414 = vmatprep.subr.mxu0 0.0
      %415 = vmatpush1.msra.mxu0 0.0
      %416 = vmatprep.subr.mxu0 0.0
      %417 = vmatpush1.msra.mxu0 0.0
      %418 = vmatprep.subr.mxu0 0.0
      %419 = vmatpush1.msra.mxu0 0.0
      %420 = vmatprep.subr.mxu0 0.0
      %421 = vmatpush1.msra.mxu0 0.0
      %422 = vmatprep.subr.mxu0 0.0
      %423 = vmatpush1.msra.mxu0 0.0
      %424 = vmatprep.subr.mxu0 0.0
      %425 = vmatpush1.msra.mxu0 0.0
      %426 = vmatprep.subr.mxu0 0.0
      %427 = vmatpush1.msra.mxu0 0.0
      %428 = vmatprep.subr.mxu0 0.0
      %429 = vmatpush1.msra.mxu0 0.0
      %430 = vmatprep.subr.mxu0 0.0
      %431 = vmatpush1.msra.mxu0 0.0
      %432 = vmatprep.subr.mxu0 0.0
      %433 = vmatpush1.msra.mxu0 0.0
      %434 = vmatprep.subr.mxu0 0.0
      %435 = vmatpush1.msra.mxu0 0.0
      %436 = vmatprep.subr.mxu0 0.0
      %437 = vmatpush1.msra.mxu0 0.0
      %438 = vmatprep.subr.mxu0 0.0
      %439 = vmatpush1.msra.mxu0 0.0
      %440 = vmatprep.subr.mxu0 0.0
      %441 = vmatpush1.msra.mxu0 %v411
      %442 = vmatprep.subr.mxu0 0.0
      %443 = vmatpush1.msra.mxu0 %v410
      %444 = vmatprep.subr.mxu0 0.0
      %445 = vmatpush2.msra.mxu0 0.0
      %446 = vmatprep.subr.mxu0 0.0
      %447 = vmatpush2.msra.mxu0 0.0
      %448 = vmatprep.subr.mxu0 0.0
      %449 = vmatpush2.msra.mxu0 0.0
      %450 = vmatprep.subr.mxu0 0.0
      %451 = vmatpush2.msra.mxu0 0.0
      %452 = vmatprep.subr.mxu0 0.0
      %453 = vmatpush2.msra.mxu0 0.0
      %454 = vmatprep.subr.mxu0 0.0
      %455 = vmatpush2.msra.mxu0 0.0
      %456 = vmatprep.subr.mxu0 0.0
      %457 = vmatpush2.msra.mxu0 0.0
      %458 = vmatprep.subr.mxu0 0.0
      %459 = vmatpush2.msra.mxu0 0.0
      %460 = vmatprep.subr.mxu0 0.0
      %461 = vmatpush2.msra.mxu0 0.0
      %462 = vmatprep.subr.mxu0 0.0
      %463 = vmatpush2.msra.mxu0 0.0
      %464 = vmatprep.subr.mxu0 0.0
      %465 = vmatpush2.msra.mxu0 0.0
      %466 = vmatprep.subr.mxu0 0.0
      %467 = vmatpush2.msra.mxu0 0.0
      %468 = vmatprep.subr.mxu0 0.0
      %469 = vmatpush2.msra.mxu0 0.0
      %470 = vmatprep.subr.mxu0 0.0
      %471 = vmatpush2.msra.mxu0 0.0
      %472 = vmatprep.subr.mxu0 0.0
      %473 = vmatpush2.msra.mxu0 0.0
      %474 = vmatprep.subr.mxu0 0.0
      %475 = vmatpush2.msra.mxu0 0.0
      %476 = vmatprep.mubr.f32.mxu0 0.0
      %477 = vmatmul.mubr.f32.gmra.mxu0 %v156
      %v478 = vpop.f32.mrf.mxu0
      %v479 = vadd.f32 0.0, %v478
      %v480 = vpop.f32.mrf.mxu0
      %481 = vmatprep.mubr.f32.mxu0 0.0
      %482 = vmatmul.mubr.f32.gmra.mxu0 %v159
      %v483 = vpop.f32.mrf.mxu0
      %v484 = vadd.f32 0.0, %v483
      %v485 = vpop.f32.mrf.mxu0
      %486 = vmatprep.mubr.f32.mxu0 0.0
      %487 = vmatmul.mubr.f32.gmra.mxu0 %v162
      %v488 = vpop.f32.mrf.mxu0
      %v489 = vadd.f32 0.0, %v488
      %v490 = vpop.f32.mrf.mxu0
      %491 = vmatprep.mubr.f32.mxu0 0.0
      %492 = vmatmul.mubr.f32.gmra.mxu0 %v165
      %v493 = vpop.f32.mrf.mxu0
      %v494 = vadd.f32 0.0, %v493
      %v495 = vpop.f32.mrf.mxu0
      %496 = vmatprep.mubr.f32.mxu0 0.0
      %497 = vmatmul.mubr.f32.gmra.mxu0 %v168
      %v498 = vpop.f32.mrf.mxu0
      %v499 = vadd.f32 0.0, %v498
      %v500 = vpop.f32.mrf.mxu0
      %501 = vmatprep.mubr.f32.mxu0 0.0
      %502 = vmatmul.mubr.f32.gmra.mxu0 %v171
      %v503 = vpop.f32.mrf.mxu0
      %v504 = vadd.f32 0.0, %v503
      %v505 = vpop.f32.mrf.mxu0
      %506 = vmatprep.mubr.f32.mxu0 0.0
      %507 = vmatmul.mubr.f32.gmra.mxu0 %v174
      %v508 = vpop.f32.mrf.mxu0
      %v509 = vadd.f32 0.0, %v508
      %v510 = vpop.f32.mrf.mxu0
      %511 = vmatprep.mubr.f32.mxu0 0.0
      %512 = vmatmul.mubr.f32.gmra.mxu0 %v177
      %v513 = vpop.f32.mrf.mxu0
      %v514 = vadd.f32 0.0, %v513
      %v515 = vpop.f32.mrf.mxu0
      %516 = vdwg.mxu0
      %s517 = scalar_lea.vmem %s143, 128
      %518 = vst.msk [vmem:[%s517] sm:$0xff] %vm154, %v479
      %519 = vst.msk [vmem:[%s517 + $0x8] sm:$0xff] %vm154, %v484
      %520 = vst.msk [vmem:[%s517 + $0x10] sm:$0xff] %vm154, %v489
      %521 = vst.msk [vmem:[%s517 + $0x18] sm:$0xff] %vm154, %v494
      %522 = vst.msk [vmem:[%s517 + $0x20] sm:$0xff] %vm154, %v499
      %523 = vst.msk [vmem:[%s517 + $0x28] sm:$0xff] %vm154, %v504
      %524 = vst.msk [vmem:[%s517 + $0x30] sm:$0xff] %vm154, %v509
      %525 = vst.msk [vmem:[%s517 + $0x38] sm:$0xff] %vm154, %v514
      %p526 = scmp.lt.s32.totalorder %s13, 1
      %s527 = scalar_select %p526, %s13, 1
      %s528 = smul.addr %s527, 24
      %s529 = smul.addr %s528, 8
      %s530 = scalar_lea.vmem %s2, %s529
      // Predicated region
      $region29: #{unit_gcn_forward.2} parent=27 // pred_check
        %p531 = pneg %p78
      $region30: #{unit_gcn_forward.2} parent=27 // pred_check_branch
        %533 = sbr.rel (%p531) target = $region32
      $region31: #{unit_gcn_forward.2} parent=27 // pred_region
        _
      $region32: #{unit_gcn_forward.2} parent=27 // pred_fallthru
        _
    $region28: #{unit_gcn_forward.2} parent=5 // pred_fallthru
      _
    %p534 = scmp.le.s32.totalorder 2, %s8
    // Predicated region
    $region33: #{unit_gcn_forward.2} parent=5 // pred_check
      %p535 = pneg %p534
    $region34: #{unit_gcn_forward.2} parent=5 // pred_check_branch
      %537 = sbr.rel (%p535) target = $region36
    $region35: #{unit_gcn_forward.2} parent=5 // pred_region
      %s538 = ssub.s32 %s8, 2
      // Predicated region
      $region37: #{unit_gcn_forward.2} parent=35 // pred_check
        %p539 = pneg %p84
      $region38: #{unit_gcn_forward.2} parent=35 // pred_check_branch
        %541 = sbr.rel (%p539) target = $region40
      $region39: #{unit_gcn_forward.2} parent=35 // pred_region
        %p542 = scmp.lt.s32.totalorder %s14, 1
        %s543 = scalar_select %p542, %s14, 1
        %s544 = smul.addr %s543, 24
        %s545 = smul.addr %s544, 8
        %s546 = scalar_lea.vmem %s2, %s545
      $region40: #{unit_gcn_forward.2} parent=35 // pred_fallthru
        _
    $region36: #{unit_gcn_forward.2} parent=5 // pred_fallthru
      _
  $region6: #{unit_gcn_forward.2} parent=0 // loop_footer
    %s12 = sadd.s32 1, %s8
  $region7: #{unit_gcn_forward.2} parent=0 // loop_footer_branch
    %7 = sbr.rel target = $region3
  $region8: #{unit_gcn_forward.2} parent=0 // loop_exit
    _

// kernel: unit_gcn_forward.3
$region0: #{unit_gcn_forward.3}
  #allocation0 [shape = 'u32[]', space=smem, size = 0x4, offset = 0x4, fixed_abs, tag = 'smem constant byte address 0x4 - core index']
  #allocation1 [shape = 'u32[144,128]{1,0:T(1,128)}', space=vmem, size = 0x12000, scoped, tag = 'internal scratch']
  %s0 = inlined_call_operand.vmem [shape: f32[2,12,256], index: 0, kind: input, shape index: {}]
  %s1 = inlined_call_operand.vmem [shape: f32[2,4,256], index: 1, kind: input, shape index: {}]
  %s2 = inlined_call_operand.vmem [shape: f32[8,12], index: 2, kind: input, shape index: {}]
  %s3 = inlined_call_operand.vmem [shape: f32[8,4], index: 3, kind: input, shape index: {}]
  %s4 = inlined_call_operand.vmem [shape: f32[8,1], index: 4, kind: input, shape index: {}]
  %s5 = inlined_call_operand.vmem [shape: f32[2,8,256], index: 5, kind: output, shape index: {}]
  %s6 = sld [smem:[#allocation0]]
  $region53: #{unit_gcn_forward.3} parent=0
    _
  %s8 = ssub.s32 1, %s6
  %s9 = scalar_select 0, %s8, %s6
  loop: start=0, step=1, limit=4
  $region2: #{unit_gcn_forward.3} parent=0 // loop_pre_header
    _
  $region3: #{unit_gcn_forward.3} parent=0 // loop_header
    %s11 = sphi 0, %s15
    %p12 = scmp.ge.s32.totalorder %s11, 4
    %s21 = sphi 0, %s23
    %s24 = sphi 0, %s21
    %s25 = sphi 0, %s24
    %s41 = sphi 0, %s25
    %s47 = sphi 0, %s49
    %s50 = sphi 0, %s47
    %s51 = sphi 0, %s50
    %s67 = sphi 0, %s51
    %s71 = sphi 0, %s71
    %s73 = sphi 0, %s71
    %s74 = sphi 0, %s73
    %s88 = sphi 0, %s74
    %s92 = sphi 0, %s92
    %s94 = sphi 0, %s92
    %s95 = sphi 0, %s94
    %s109 = sphi 0, %s95
    %s113 = sphi 0, %s113
    %s115 = sphi 0, %s113
    %s116 = sphi 0, %s115
    %s130 = sphi 0, %s116
    %s136 = sphi 0, %s138
    %s139 = sphi 0, %s136
    %s140 = sphi 0, %s139
    %s156 = sphi 0, %s140
  $region4: #{unit_gcn_forward.3} parent=0 // loop_header_branch
    %14 = sbr.rel (%p12) target = $region8
  $region5: #{unit_gcn_forward.3} parent=0 // loop_body
    %s16 = ssub.s32 %s11, 1
    %s17 = ssub.s32 %s11, 2
    %s18 = sadd.s32 %s11, 1
    %s19 = ssub.s32 %s11, %s18
    %p20 = scmp.eq.s32.totalorder %s19, 0
    %s22 = sadd.s32 %s21, 1
    %s23 = scalar_select %p20, %s21, %s22
    %p26 = pneg %p20
    %p27 = scmp.eq.s32.totalorder %s11, 1
    %p28 = por %p26, %p27
    %p29 = scmp.ne.s32.totalorder %s21, %s24
    %p30 = scmp.eq.s32.totalorder %s11, 0
    %p31 = por %p29, %p30
    %p32 = scmp.ne.s32.totalorder %s21, %s24
    %p33 = scmp.eq.s32.totalorder %s16, 1
    %p34 = por %p32, %p33
    %p35 = scmp.ne.s32.totalorder %s24, %s25
    %p36 = scmp.eq.s32.totalorder %s16, 0
    %p37 = por %p35, %p36
    %p38 = scmp.ne.s32.totalorder %s24, %s25
    %p39 = scmp.eq.s32.totalorder %s17, 1
    %p40 = por %p38, %p39
    %p42 = scmp.ne.s32.totalorder %s25, %s41
    %p43 = scmp.eq.s32.totalorder %s17, 0
    %p44 = por %p42, %p43
    %s45 = ssub.s32 %s11, %s18
    %p46 = scmp.eq.s32.totalorder %s45, 0
    %s48 = sadd.s32 %s47, 1
    %s49 = scalar_select %p46, %s47, %s48
    %p52 = pneg %p46
    %p53 = scmp.eq.s32.totalorder %s11, 1
    %p54 = por %p52, %p53
    %p55 = scmp.ne.s32.totalorder %s47, %s50
    %p56 = scmp.eq.s32.totalorder %s11, 0
    %p57 = por %p55, %p56
    %p58 = scmp.ne.s32.totalorder %s47, %s50
    %p59 = scmp.eq.s32.totalorder %s16, 1
    %p60 = por %p58, %p59
    %p61 = scmp.ne.s32.totalorder %s50, %s51
    %p62 = scmp.eq.s32.totalorder %s16, 0
    %p63 = por %p61, %p62
    %p64 = scmp.ne.s32.totalorder %s50, %s51
    %p65 = scmp.eq.s32.totalorder %s17, 1
    %p66 = por %p64, %p65
    %p68 = scmp.ne.s32.totalorder %s51, %s67
    %p69 = scmp.eq.s32.totalorder %s17, 0
    %p70 = por %p68, %p69
    %s72 = sadd.s32 %s71, 1
    %p75 = scmp.eq.s32.totalorder %s11, 1
    %p76 = scmp.ne.s32.totalorder %s71, %s73
    %p77 = scmp.eq.s32.totalorder %s11, 0
    %p78 = por %p76, %p77
    %p79 = scmp.ne.s32.totalorder %s71, %s73
    %p80 = scmp.eq.s32.totalorder %s16, 1
    %p81 = por %p79, %p80
    %p82 = scmp.ne.s32.totalorder %s73, %s74
    %p83 = scmp.eq.s32.totalorder %s16, 0
    %p84 = por %p82, %p83
    %p85 = scmp.ne.s32.totalorder %s73, %s74
    %p86 = scmp.eq.s32.totalorder %s17, 1
    %p87 = por %p85, %p86
    %p89 = scmp.ne.s32.totalorder %s74, %s88
    %p90 = scmp.eq.s32.totalorder %s17, 0
    %p91 = por %p89, %p90
    %s93 = sadd.s32 %s92, 1
    %p96 = scmp.eq.s32.totalorder %s11, 1
    %p97 = scmp.ne.s32.totalorder %s92, %s94
    %p98 = scmp.eq.s32.totalorder %s11, 0
    %p99 = por %p97, %p98
    %p100 = scmp.ne.s32.totalorder %s92, %s94
    %p101 = scmp.eq.s32.totalorder %s16, 1
    %p102 = por %p100, %p101
    %p103 = scmp.ne.s32.totalorder %s94, %s95
    %p104 = scmp.eq.s32.totalorder %s16, 0
    %p105 = por %p103, %p104
    %p106 = scmp.ne.s32.totalorder %s94, %s95
    %p107 = scmp.eq.s32.totalorder %s17, 1
    %p108 = por %p106, %p107
    %p110 = scmp.ne.s32.totalorder %s95, %s109
    %p111 = scmp.eq.s32.totalorder %s17, 0
    %p112 = por %p110, %p111
    %s114 = sadd.s32 %s113, 1
    %p117 = scmp.eq.s32.totalorder %s11, 1
    %p118 = scmp.ne.s32.totalorder %s113, %s115
    %p119 = scmp.eq.s32.totalorder %s11, 0
    %p120 = por %p118, %p119
    %p121 = scmp.ne.s32.totalorder %s113, %s115
    %p122 = scmp.eq.s32.totalorder %s16, 1
    %p123 = por %p121, %p122
    %p124 = scmp.ne.s32.totalorder %s115, %s116
    %p125 = scmp.eq.s32.totalorder %s16, 0
    %p126 = por %p124, %p125
    %p127 = scmp.ne.s32.totalorder %s115, %s116
    %p128 = scmp.eq.s32.totalorder %s17, 1
    %p129 = por %p127, %p128
    %p131 = scmp.ne.s32.totalorder %s116, %s130
    %p132 = scmp.eq.s32.totalorder %s17, 0
    %p133 = por %p131, %p132
    %s134 = ssub.s32 %s11, %s18
    %p135 = scmp.eq.s32.totalorder %s134, 0
    %s137 = sadd.s32 %s136, 1
    %s138 = scalar_select %p135, %s136, %s137
    %p141 = pneg %p135
    %p142 = scmp.eq.s32.totalorder %s11, 1
    %p143 = por %p141, %p142
    %p144 = scmp.ne.s32.totalorder %s136, %s139
    %p145 = scmp.eq.s32.totalorder %s11, 0
    %p146 = por %p144, %p145
    %p147 = scmp.ne.s32.totalorder %s136, %s139
    %p148 = scmp.eq.s32.totalorder %s16, 1
    %p149 = por %p147, %p148
    %p150 = scmp.ne.s32.totalorder %s139, %s140
    %p151 = scmp.eq.s32.totalorder %s16, 0
    %p152 = por %p150, %p151
    %p153 = scmp.ne.s32.totalorder %s139, %s140
    %p154 = scmp.eq.s32.totalorder %s17, 1
    %p155 = por %p153, %p154
    %p157 = scmp.ne.s32.totalorder %s140, %s156
    %p158 = scmp.eq.s32.totalorder %s17, 0
    %p159 = por %p157, %p158
    %p160 = scmp.le.s32.totalorder 1, %s11
    %p161 = scmp.lt.s32.totalorder %s11, 3
    %p162 = pnand %p160, %p161
    %p163 = pneg %p162
    // Predicated region
    $region9: #{unit_gcn_forward.3} parent=5 // pred_check
      _
    $region10: #{unit_gcn_forward.3} parent=5 // pred_check_branch
      %165 = sbr.rel (%p162) target = $region12
    $region11: #{unit_gcn_forward.3} parent=5 // pred_region
      %s166 = ssub.s32 %s11, 1
      // Predicated region
      $region13: #{unit_gcn_forward.3} parent=11 // pred_check
        %p167 = pneg %p84
      $region14: #{unit_gcn_forward.3} parent=11 // pred_check_branch
        %169 = sbr.rel (%p167) target = $region16
      $region15: #{unit_gcn_forward.3} parent=11 // pred_region
        _
      $region16: #{unit_gcn_forward.3} parent=11 // pred_fallthru
        _
      // Predicated region
      $region17: #{unit_gcn_forward.3} parent=11 // pred_check
        %p170 = pneg %p105
      $region18: #{unit_gcn_forward.3} parent=11 // pred_check_branch
        %172 = sbr.rel (%p170) target = $region20
      $region19: #{unit_gcn_forward.3} parent=11 // pred_region
        _
      $region20: #{unit_gcn_forward.3} parent=11 // pred_fallthru
        _
      // Predicated region
      $region21: #{unit_gcn_forward.3} parent=11 // pred_check
        %p173 = pneg %p126
      $region22: #{unit_gcn_forward.3} parent=11 // pred_check_branch
        %175 = sbr.rel (%p173) target = $region24
      $region23: #{unit_gcn_forward.3} parent=11 // pred_region
        _
      $region24: #{unit_gcn_forward.3} parent=11 // pred_fallthru
        _
    $region12: #{unit_gcn_forward.3} parent=5 // pred_fallthru
      _
    %p176 = scmp.lt.s32.totalorder %s11, 2
    // Predicated region
    $region25: #{unit_gcn_forward.3} parent=5 // pred_check
      %p177 = pneg %p176
    $region26: #{unit_gcn_forward.3} parent=5 // pred_check_branch
      %179 = sbr.rel (%p177) target = $region28
    $region27: #{unit_gcn_forward.3} parent=5 // pred_region
      // Predicated region
      $region29: #{unit_gcn_forward.3} parent=27 // pred_check
        %p180 = pneg %p31
      $region30: #{unit_gcn_forward.3} parent=27 // pred_check_branch
        %182 = sbr.rel (%p180) target = $region32
      $region31: #{unit_gcn_forward.3} parent=27 // pred_region
        %p183 = scmp.lt.s32.totalorder %s11, 1
        %s184 = scalar_select %p183, %s11, 1
        %s185 = smul.addr %s184, 4
        %s186 = smul.addr %s185, 8
        %s187 = scalar_lea.vmem %s0, %s186
      $region32: #{unit_gcn_forward.3} parent=27 // pred_fallthru
        _
      // Predicated region
      $region33: #{unit_gcn_forward.3} parent=27 // pred_check
        %p188 = pneg %p57
      $region34: #{unit_gcn_forward.3} parent=27 // pred_check_branch
        %190 = sbr.rel (%p188) target = $region36
      $region35: #{unit_gcn_forward.3} parent=27 // pred_region
        %p191 = scmp.lt.s32.totalorder %s11, 1
        %s192 = scalar_select %p191, %s11, 1
        %s193 = smul.addr %s192, 2
        %s194 = smul.addr %s193, 4
        %s195 = scalar_lea.vmem %s1, %s194
      $region36: #{unit_gcn_forward.3} parent=27 // pred_fallthru
        _
    $region28: #{unit_gcn_forward.3} parent=5 // pred_fallthru
      _
    %p196 = scmp.le.s32.totalorder 1, %s11
    %p197 = scmp.lt.s32.totalorder %s11, 3
    %p198 = pnand %p196, %p197
    %p199 = pneg %p198
    // Predicated region
    $region37: #{unit_gcn_forward.3} parent=5 // pred_check
      _
    $region38: #{unit_gcn_forward.3} parent=5 // pred_check_branch
      %201 = sbr.rel (%p198) target = $region40
    $region39: #{unit_gcn_forward.3} parent=5 // pred_region
      %s202 = ssub.s32 %s11, 1
      %p203 = scmp.lt.s32.totalorder %s16, 1
      %s204 = scalar_select %p203, %s16, 1
      %s205 = smul.addr %s204, 4
      %s206 = smul.addr %s205, 8
      %s207 = scalar_lea.vmem %s0, %s206
      %p208 = pneg %p37
      %p209 = pneg %p34
      %p210 = scmp.lt.s32.totalorder %s16, 1
      %s211 = scalar_select %p210, %s16, 1
      %s212 = smul.addr %s211, 2
      %s213 = smul.addr %s212, 4
      %s214 = scalar_lea.vmem %s1, %s213
      %p215 = pneg %p63
      %p216 = pneg %p60
      %p217 = pneg %p84
      %p218 = pneg %p81
      %p219 = pneg %p105
      %p220 = pneg %p102
      %p221 = pneg %p126
      %p222 = pneg %p123
      %p223 = pneg %p152
      %p224 = pneg %p149
      %p225 = scmp.lt.s32.totalorder %s16, 1
      %s226 = scalar_select %p225, %s16, 1
      %s227 = smul.addr %s226, 2
      %s228 = smul.addr %s227, 8
      %s229 = scalar_lea.vmem %s5, %s228
      %p230 = scmp.lt.s32.totalorder %s16, 1
      %s231 = scalar_select %p230, %s16, 1
      %s232 = smul.addr %s231, 4
      %s233 = smul.addr %s232, 8
      %s234 = scalar_lea.vmem %s0, %s233
      %p235 = scmp.lt.s32.totalorder %s16, 1
      %s236 = scalar_select %p235, %s16, 1
      %s237 = smul.addr %s236, 2
      %s238 = smul.addr %s237, 4
      %s239 = scalar_lea.vmem %s1, %s238
      %p240 = scmp.lt.s32.totalorder %s16, 1
      %s241 = scalar_select %p240, %s16, 1
      %s242 = smul.addr %s241, 2
      %s243 = smul.addr %s242, 8
      %s244 = scalar_lea.vmem %s5, %s243
      %v245 = vld [vmem:[%s2] sm:$0xff]
      %v246 = vld [vmem:[%s234] sm:$0xff]
      %v247 = vld [vmem:[%s234 + $0x8] sm:$0xff]
      %v248 = vld [vmem:[%s234 + $0x10] sm:$0xf]
      %v249 = vld [vmem:[%s234 + $0x18] sm:$0xf]
      %v250 = vld [vmem:[%s3] sm:$0xff]
      %v251 = vld [vmem:[%s239] sm:$0xff]
      %v253 = vcombine.high %v251, %v251
      %vm254 = vcmask 31744
      %v256 = vsel %vm254, %v250, 0
      %vm258 = vcmask 1043456
      %v259 = vsel %vm258, %v251, 0
      %v261 = vsel %vm258, %v253, 0
      %263 = vmatprep.subr.mxu0 0.0
      %264 = vmatpush1.msra.mxu0 0.0
      %265 = vmatprep.subr.mxu0 0.0
      %266 = vmatpush1.msra.mxu0 0.0
      %267 = vmatprep.subr.mxu0 0.0
      %268 = vmatpush1.msra.mxu0 0.0
      %269 = vmatprep.subr.mxu0 0.0
      %270 = vmatpush1.msra.mxu0 0.0
      %271 = vmatprep.subr.mxu0 0.0
      %272 = vmatpush1.msra.mxu0 0.0
      %273 = vmatprep.subr.mxu0 0.0
      %274 = vmatpush1.msra.mxu0 0.0
      %275 = vmatprep.subr.mxu0 0.0
      %276 = vmatpush1.msra.mxu0 0.0
      %277 = vmatprep.subr.mxu0 0.0
      %278 = vmatpush1.msra.mxu0 0.0
      %279 = vmatprep.subr.mxu0 0.0
      %280 = vmatpush1.msra.mxu0 0.0
      %281 = vmatprep.subr.mxu0 0.0
      %282 = vmatpush1.msra.mxu0 0.0
      %283 = vmatprep.subr.mxu0 0.0
      %284 = vmatpush1.msra.mxu0 0.0
      %285 = vmatprep.subr.mxu0 0.0
      %286 = vmatpush1.msra.mxu0 0.0
      %287 = vmatprep.subr.mxu0 0.0
      %288 = vmatpush1.msra.mxu0 0.0
      %289 = vmatprep.subr.mxu0 0.0
      %290 = vmatpush1.msra.mxu0 0.0
      %291 = vmatprep.subr.mxu0 0.0
      %292 = vmatpush1.msra.mxu0 0.0
      %293 = vmatprep.subr.mxu0 %v261
      %294 = vmatpush1.msra.mxu0 %v259
      %295 = vmatprep.subr.mxu0 0.0
      %296 = vmatpush2.msra.mxu0 0.0
      %297 = vmatprep.subr.mxu0 0.0
      %298 = vmatpush2.msra.mxu0 0.0
      %299 = vmatprep.subr.mxu0 0.0
      %300 = vmatpush2.msra.mxu0 0.0
      %301 = vmatprep.subr.mxu0 0.0
      %302 = vmatpush2.msra.mxu0 0.0
      %303 = vmatprep.subr.mxu0 0.0
      %304 = vmatpush2.msra.mxu0 0.0
      %305 = vmatprep.subr.mxu0 0.0
      %306 = vmatpush2.msra.mxu0 0.0
      %307 = vmatprep.subr.mxu0 0.0
      %308 = vmatpush2.msra.mxu0 0.0
      %309 = vmatprep.subr.mxu0 0.0
      %310 = vmatpush2.msra.mxu0 0.0
      %311 = vmatprep.subr.mxu0 0.0
      %312 = vmatpush2.msra.mxu0 0.0
      %313 = vmatprep.subr.mxu0 0.0
      %314 = vmatpush2.msra.mxu0 0.0
      %315 = vmatprep.subr.mxu0 0.0
      %316 = vmatpush2.msra.mxu0 0.0
      %317 = vmatprep.subr.mxu0 0.0
      %318 = vmatpush2.msra.mxu0 0.0
      %319 = vmatprep.subr.mxu0 0.0
      %320 = vmatpush2.msra.mxu0 0.0
      %321 = vmatprep.subr.mxu0 0.0
      %322 = vmatpush2.msra.mxu0 0.0
      %323 = vmatprep.subr.mxu0 0.0
      %324 = vmatpush2.msra.mxu0 0.0
      %325 = vmatprep.subr.mxu0 0.0
      %326 = vmatpush2.msra.mxu0 0.0
      %327 = vmatprep.mubr.f32.mxu0 0.0
      %328 = vmatmul.mubr.f32.gmra.mxu0 %v256
      %v329 = vpop.f32.mrf.mxu0
      %v330 = vadd.f32 0.0, %v329
      %v331 = vpop.f32.mrf.mxu0
      %v332 = vadd.f32 0.0, %v331
      %333 = vdwg.mxu0
      %vm334 = vcmask 97280
      %v336 = vsel %vm334, %v245, 0
      %v339 = vsel %vm258, %v248, 0
      %v342 = vsel %vm258, %v249, 0
      %344 = vmatprep.subr.mxu0 0.0
      %345 = vmatpush1.msra.mxu0 0.0
      %346 = vmatprep.subr.mxu0 0.0
      %347 = vmatpush1.msra.mxu0 0.0
      %348 = vmatprep.subr.mxu0 0.0
      %349 = vmatpush1.msra.mxu0 0.0
      %350 = vmatprep.subr.mxu0 0.0
      %351 = vmatpush1.msra.mxu0 0.0
      %352 = vmatprep.subr.mxu0 0.0
      %353 = vmatpush1.msra.mxu0 0.0
      %354 = vmatprep.subr.mxu0 0.0
      %355 = vmatpush1.msra.mxu0 0.0
      %356 = vmatprep.subr.mxu0 0.0
      %357 = vmatpush1.msra.mxu0 0.0
      %358 = vmatprep.subr.mxu0 0.0
      %359 = vmatpush1.msra.mxu0 0.0
      %360 = vmatprep.subr.mxu0 0.0
      %361 = vmatpush1.msra.mxu0 0.0
      %362 = vmatprep.subr.mxu0 0.0
      %363 = vmatpush1.msra.mxu0 0.0
      %364 = vmatprep.subr.mxu0 0.0
      %365 = vmatpush1.msra.mxu0 0.0
      %366 = vmatprep.subr.mxu0 0.0
      %367 = vmatpush1.msra.mxu0 0.0
      %368 = vmatprep.subr.mxu0 0.0
      %369 = vmatpush1.msra.mxu0 0.0
      %370 = vmatprep.subr.mxu0 0.0
      %371 = vmatpush1.msra.mxu0 0.0
      %372 = vmatprep.subr.mxu0 %v342
      %373 = vmatpush1.msra.mxu0 %v339
      %374 = vmatprep.subr.mxu0 %v247
      %375 = vmatpush1.msra.mxu0 %v246
      %376 = vmatprep.subr.mxu0 0.0
      %377 = vmatpush2.msra.mxu0 0.0
      %378 = vmatprep.subr.mxu0 0.0
      %379 = vmatpush2.msra.mxu0 0.0
      %380 = vmatprep.subr.mxu0 0.0
      %381 = vmatpush2.msra.mxu0 0.0
      %382 = vmatprep.subr.mxu0 0.0
      %383 = vmatpush2.msra.mxu0 0.0
      %384 = vmatprep.subr.mxu0 0.0
      %385 = vmatpush2.msra.mxu0 0.0
      %386 = vmatprep.subr.mxu0 0.0
      %387 = vmatpush2.msra.mxu0 0.0
      %388 = vmatprep.subr.mxu0 0.0
      %389 = vmatpush2.msra.mxu0 0.0
      %390 = vmatprep.subr.mxu0 0.0
      %391 = vmatpush2.msra.mxu0 0.0
      %392 = vmatprep.subr.mxu0 0.0
      %393 = vmatpush2.msra.mxu0 0.0
      %394 = vmatprep.subr.mxu0 0.0
      %395 = vmatpush2.msra.mxu0 0.0
      %396 = vmatprep.subr.mxu0 0.0
      %397 = vmatpush2.msra.mxu0 0.0
      %398 = vmatprep.subr.mxu0 0.0
      %399 = vmatpush2.msra.mxu0 0.0
      %400 = vmatprep.subr.mxu0 0.0
      %401 = vmatpush2.msra.mxu0 0.0
      %402 = vmatprep.subr.mxu0 0.0
      %403 = vmatpush2.msra.mxu0 0.0
      %404 = vmatprep.subr.mxu0 0.0
      %405 = vmatpush2.msra.mxu0 0.0
      %406 = vmatprep.subr.mxu0 0.0
      %407 = vmatpush2.msra.mxu0 0.0
      %408 = vmatprep.mubr.f32.mxu0 0.0
      %409 = vmatmul.mubr.f32.gmra.mxu0 %v336
      %v410 = vpop.f32.mrf.mxu0
      %v411 = vadd.f32 %v330, %v410
      %v412 = vpop.f32.mrf.mxu0
      %v413 = vadd.f32 %v332, %v412
      %414 = vdwg.mxu0
      %v415 = vld [vmem:[%s4] sm:$0xff]
      %417 = vset.pattern.permute.xlu0 0
      %418 = vperm.xlu0 %417, %v415
      %v419 = vpop.permute.xlu0 %418
      %v421 = vadd.f32 %v411, %v419
      %v422 = vadd.f32 %v413, %v419
      %v423 = vmax.f32 %v421, 0.0
      %v424 = vmax.f32 %v422, 0.0
      %425 = vst [vmem:[%s244] sm:$0xff] %v423
      %426 = vst [vmem:[%s244 + $0x8] sm:$0xff] %v424
      %p427 = scmp.lt.s32.totalorder %s16, 1
      %s428 = scalar_select %p427, %s16, 1
      %s429 = smul.addr %s428, 2
      %s430 = smul.addr %s429, 8
      %s431 = scalar_lea.vmem %s5, %s430
      // Predicated region
      $region41: #{unit_gcn_forward.3} parent=39 // pred_check
        %p432 = pneg %p149
      $region42: #{unit_gcn_forward.3} parent=39 // pred_check_branch
        %434 = sbr.rel (%p432) target = $region44
      $region43: #{unit_gcn_forward.3} parent=39 // pred_region
        _
      $region44: #{unit_gcn_forward.3} parent=39 // pred_fallthru
        _
    $region40: #{unit_gcn_forward.3} parent=5 // pred_fallthru
      _
    %p435 = scmp.le.s32.totalorder 2, %s11
    // Predicated region
    $region45: #{unit_gcn_forward.3} parent=5 // pred_check
      %p436 = pneg %p435
    $region46: #{unit_gcn_forward.3} parent=5 // pred_check_branch
      %438 = sbr.rel (%p436) target = $region48
    $region47: #{unit_gcn_forward.3} parent=5 // pred_region
      %s439 = ssub.s32 %s11, 2
      // Predicated region
      $region49: #{unit_gcn_forward.3} parent=47 // pred_check
        %p440 = pneg %p155
      $region50: #{unit_gcn_forward.3} parent=47 // pred_check_branch
        %442 = sbr.rel (%p440) target = $region52
      $region51: #{unit_gcn_forward.3} parent=47 // pred_region
        %p443 = scmp.lt.s32.totalorder %s17, 1
        %s444 = scalar_select %p443, %s17, 1
        %s445 = smul.addr %s444, 2
        %s446 = smul.addr %s445, 8
        %s447 = scalar_lea.vmem %s5, %s446
      $region52: #{unit_gcn_forward.3} parent=47 // pred_fallthru
        _
    $region48: #{unit_gcn_forward.3} parent=5 // pred_fallthru
      _
  $region6: #{unit_gcn_forward.3} parent=0 // loop_footer
    %s15 = sadd.s32 1, %s11
  $region7: #{unit_gcn_forward.3} parent=0 // loop_footer_branch
    %10 = sbr.rel target = $region3
  $region8: #{unit_gcn_forward.3} parent=0 // loop_exit
    _

</llo_original>
